<compile_context>
chip_gen: v7x
topology: tpu7x:2x2x1
jax: 0.10.0
libtpu: 0.0.40
codegen_flags: <defaults>
</compile_context>

<pallas_src>
import jax
import jax.numpy as jnp
from jax.experimental import pallas as pl
from jax.experimental.pallas import tpu as pltpu


def _round_up(n: int, m: int) -> int:
    return ((n + m - 1) // m) * m


def _cdiv(a: int, b: int) -> int:
    return -(-a // b)


_SUB = 16  # sublane multiple legal for both f32 (8) and bf16 (16) packing


def mlp_kernel(x_ref, w1_ref, b1_ref, w2_ref, b2_ref, o_ref, acc_ref):
    """One (batch-tile, K-tile) grid step.

    grid = (batch tiles, in_dim/K tiles).  K is a reduction axis: the first
    matmul accumulates into an f32 VMEM scratch; bias + ReLU + second matmul
    run once at the last K step (init/finalize via pl.when).
    """
    k = pl.program_id(1)

    @pl.when(k == 0)
    def _():
        acc_ref[...] = jnp.zeros_like(acc_ref)

    # First linear on the MXU with f32 accumulation.
    acc_ref[...] += jnp.dot(x_ref[...], w1_ref[...],
                            preferred_element_type=jnp.float32)

    @pl.when(k == pl.num_programs(1) - 1)
    def _():
        # Bias add + ReLU in f32 on the VPU.
        h = jnp.maximum(acc_ref[...] + b1_ref[...], 0.0)
        # Second linear on the MXU; cast back to the weight dtype so the bf16
        # path stays on the fast MXU datapath (no-op for the f32 path).
        out = jnp.dot(h.astype(w2_ref.dtype), w2_ref[...],
                      preferred_element_type=jnp.float32)
        o_ref[...] = (out + b2_ref[...]).astype(o_ref.dtype)
        # TODO(synk): for out_dim << 128 at very large B, a VPU broadcast-mul +
        # lane reduction with a narrow output would cut the 128x write
        # amplification of the padded store; negligible at these sizes.


def _vmem_budget_bytes() -> int:
    """Physical VMEM minus headroom for Mosaic internal scratch/semaphores."""
    try:
        phys = int(pltpu.get_tpu_info().vmem_capacity_bytes)
    except Exception:
        phys = 64 * 1024 * 1024  # conservative (v7x-sized) fallback
    # v5e/v6e (128 MiB) -> ~112 MiB budget; v7x (64 MiB) -> ~56 MiB budget.
    return phys - max(8 << 20, phys // 8)


def _pad_dim(d: int) -> int:
    # Dims <= 128 stay 128-aligned; larger dims align to 256 to feed the full
    # 2x256x256 MXU on v6e/v7x (128 is already optimal on v5e's 128x128 MXU).
    return _round_up(max(d, 128), 128 if d <= 128 else 256)


def prepare_mlp_params(w1, b1, w2, b2, *, compute_dtype=jnp.bfloat16):
    """One-time parameter prep, hoisted out of the per-call path.

    Transposes to (in, out) layout and zero-pads feature dims to lane-dense
    multiples of 128/256.  Padding is exact: padded in_dim columns multiply
    zero x columns, padded hidden units get bias 0 -> relu(0)=0 -> zero rows
    of w2, and padded output columns are sliced off after the kernel.
    """
    P, in_dim = w1.shape
    out_dim, P2 = w2.shape
    assert P2 == P and b1.shape == (P,) and b2.shape == (out_dim,)

    in_p, P_p, out_p = _pad_dim(in_dim), _pad_dim(P), _pad_dim(out_dim)

    def pad2(a, rows, cols, dt):
        a = a.astype(dt)
        if a.shape == (rows, cols):
            return a                      # already aligned: no HBM copy
        return jnp.zeros((rows, cols), dt).at[:a.shape[0], :a.shape[1]].set(a)

    return dict(
        w1=pad2(w1.T, in_p, P_p, compute_dtype),
        b1=pad2(b1.reshape(1, -1), 1, P_p, jnp.float32),
        w2=pad2(w2.T, P_p, out_p, compute_dtype),
        b2=pad2(b2.reshape(1, -1), 1, out_p, jnp.float32),
        in_dim=in_dim, P=P, out_dim=out_dim, compute_dtype=compute_dtype,
    )


def _choose_tiles(B, in_p, P_p, out_p, csize, osize, budget, block_b):
    # Batch tiles: minimize padding (tb = ceil(B / n_tiles)) and keep >= 2
    # grid steps when B allows, so ("parallel", ...) uses both v7x cores.
    n_b = _cdiv(B, block_b)
    if n_b == 1 and B > _SUB:
        n_b = 2
    tb = _round_up(_cdiv(B, n_b), _SUB)

    def fits(tb_, tk_):
        n_k = _cdiv(in_p, tk_)
        w1_bufs = 1 if n_k == 1 else 2           # resident vs pipelined
        return (2 * tb_ * tk_ * csize            # x tiles (double-buffered)
                + w1_bufs * tk_ * P_p * csize    # w1 tile(s)
                + P_p * out_p * csize            # w2 (resident, single buffer)
                + (P_p + out_p) * 4              # biases (f32)
                + 2 * tb_ * out_p * osize        # out tiles (double-buffered)
                + tb_ * P_p * 4                  # f32 accumulator scratch
                ) <= budget

    # Largest K tile (multiple of 128 that divides in_p) fitting the budget.
    tk = 128
    for cand in range(in_p, 127, -128):
        if in_p % cand == 0 and fits(tb, cand):
            tk = cand
            break
    # If even tk=128 does not fit, shrink the batch tile instead.
    while not fits(tb, tk) and tb > _SUB:
        tb = _round_up(tb // 2, _SUB)
    return tb, tk


def two_layer_mlp_prepared(x, params, *, block_b=None):
    """relu(x @ w1.T + b1) @ w2.T + b2 using prepared (padded) parameters."""
    B, in_dim = x.shape
    assert in_dim == params["in_dim"]
    cdt = params["compute_dtype"]
    w1_t, b1_p, w2_t, b2_p = params["w1"], params["b1"], params["w2"], params["b2"]
    in_p, P_p = w1_t.shape
    out_p = w2_t.shape[1]
    csize = jnp.dtype(cdt).itemsize
    osize = jnp.dtype(x.dtype).itemsize

    budget = _vmem_budget_bytes()
    if block_b is None:
        # Bigger tiles on 128 MiB (v5e/v6e) parts; stay modest on v7x (64 MiB).
        block_b = 1024 if budget >= (96 << 20) else 512
    # Tile-fit model is approximate; leave 25% slack for compiler padding.
    tb, tk = _choose_tiles(B, in_p, P_p, out_p, csize, osize,
                           (budget * 3) // 4, block_b)
    B_p = _round_up(B, tb)
    n_b, n_k = B_p // tb, in_p // tk

    # Pad/cast x only when needed: skip the extra HBM round trip entirely when
    # the caller already supplies an aligned array in the compute dtype.
    if x.shape == (B_p, in_p) and x.dtype == cdt:
        x_p = x
    else:
        x_p = jnp.zeros((B_p, in_p), cdt).at[:B, :in_dim].set(x.astype(cdt))

    cost = pl.CostEstimate(
        flops=2 * B * (in_dim * params["P"] + params["P"] * params["out_dim"]),
        bytes_accessed=(B_p * in_p + in_p * P_p + P_p * out_p) * csize
        + (P_p + out_p) * 4 + B_p * out_p * osize,
        transcendentals=0,
    )

    def build(resident_mode):
        w1_mode = resident_mode if n_k == 1 else None
        return pl.pallas_call(
            mlp_kernel,
            out_shape=jax.ShapeDtypeStruct((B_p, out_p), x.dtype),
            grid=(n_b, n_k),
            in_specs=[
                # Activations: one (batch, K) tile per step (double-buffered).
                pl.BlockSpec((tb, tk), lambda i, k: (i, k)),
                # w1: K-tiled; resident (single-buffered) when n_k == 1.
                pl.BlockSpec((tk, P_p), lambda i, k: (k, 0),
                             pipeline_mode=w1_mode),
                # Resident weights/biases: same block every step.
                pl.BlockSpec((1, P_p), lambda i, k: (0, 0),
                             pipeline_mode=resident_mode),
                pl.BlockSpec((P_p, out_p), lambda i, k: (0, 0),
                             pipeline_mode=resident_mode),
                pl.BlockSpec((1, out_p), lambda i, k: (0, 0),
                             pipeline_mode=resident_mode),
            ],
            out_specs=pl.BlockSpec((tb, out_p), lambda i, k: (i, 0)),
            scratch_shapes=[pltpu.VMEM((tb, P_p), jnp.float32)],
            compiler_params=pltpu.CompilerParams(
                dimension_semantics=("parallel", "arbitrary"),
                vmem_limit_bytes=budget,
            ),
            cost_estimate=cost,
        )

    # Resident (constant-index_map) operands should not be double-buffered;
    # fall back to default buffering if this JAX build rejects Buffered(1).
    try:
        out_padded = build(pl.Buffered(1))(x_p, w1_t, b1_p, w2_t, b2_p)
    except Exception:
        out_padded = build(None)(x_p, w1_t, b1_p, w2_t, b2_p)

    return out_padded[:B, :params["out_dim"]]


def two_layer_mlp(x, w1, b1, w2, b2, *, compute_dtype=jnp.bfloat16, block_b=None):
    """Convenience one-shot wrapper (prep + call).

    For repeated calls, use prepare_mlp_params() once and
    two_layer_mlp_prepared() per step so the weight transpose/pad is not
    re-materialized in HBM every call.
    """
    params = prepare_mlp_params(w1, b1, w2, b2, compute_dtype=compute_dtype)
    return two_layer_mlp_prepared(x, params, block_b=block_b)


def reference_mlp(x, w1, b1, w2, b2):
    # Pure-JAX reference mirroring torch.nn.Linear semantics: y = x @ W.T + b
    h = jnp.maximum(x @ w1.T + b1, 0.0)
    return h @ w2.T + b2


if __name__ == "__main__":
    # Module-implied shapes: X is (batch, in_dim); hidden P; out_dim=1.
    batch, in_dim, P, out_dim = 8, 32, 64, 1

    key = jax.random.PRNGKey(0)
    kx, kw1, kb1, kw2, kb2 = jax.random.split(key, 5)

    x = jax.random.normal(kx, (batch, in_dim), dtype=jnp.float32)
    # Deterministic parameter init (nn.Linear stores weight as (out, in)).
    w1 = jax.random.normal(kw1, (P, in_dim), dtype=jnp.float32) * 0.1
    b1 = jax.random.normal(kb1, (P,), dtype=jnp.float32) * 0.1
    w2 = jax.random.normal(kw2, (out_dim, P), dtype=jnp.float32) * 0.1
    b2 = jax.random.normal(kb2, (out_dim,), dtype=jnp.float32) * 0.1

    ref = reference_mlp(x, w1, b1, w2, b2)

    # f32 path: tight tolerance against the reference (params prepared once).
    params_f32 = prepare_mlp_params(w1, b1, w2, b2, compute_dtype=jnp.float32)
    out_f32 = jax.block_until_ready(two_layer_mlp_prepared(x, params_f32))
    assert out_f32.shape == (batch, out_dim)
    assert jnp.allclose(out_f32, ref, atol=1e-5, rtol=1e-5)

    # bf16 MXU fast path with f32 accumulation; reuse prepared params twice to
    # exercise the hoisted one-time prep.
    params_bf16 = prepare_mlp_params(w1, b1, w2, b2, compute_dtype=jnp.bfloat16)
    out_bf16 = jax.block_until_ready(two_layer_mlp_prepared(x, params_bf16))
    assert out_bf16.shape == (batch, out_dim)
    assert jnp.allclose(out_bf16, ref, atol=5e-2, rtol=5e-2)
    _ = jax.block_until_ready(two_layer_mlp_prepared(x, params_bf16))

    print("KERNEL_OK")
</pallas_src>

<mosaic_0001>
module attributes {stable_mosaic.version = 11 : i64} {
  func.func @mlp_kernel(%arg0: i32, %arg1: i32, %arg2: memref<16x128xf32, #tpu.memory_space<vmem>>, %arg3: memref<128x128xf32, #tpu.memory_space<vmem>>, %arg4: memref<1x128xf32, #tpu.memory_space<vmem>>, %arg5: memref<128x128xf32, #tpu.memory_space<vmem>>, %arg6: memref<1x128xf32, #tpu.memory_space<vmem>>, %arg7: memref<16x128xf32, #tpu.memory_space<vmem>>, %arg8: memref<16x128xf32, #tpu.memory_space<vmem>>) attributes {dimension_semantics = [#tpu.dimension_semantics<parallel>, #tpu.dimension_semantics<arbitrary>], iteration_bounds = array<i64: 1, 1>, scalar_prefetch = 0 : i64, scratch_operands = 1 : i64, tpu.core_type = #tpu.core_type<tc>, window_params = [{transform_indices = @transform_0, window_bounds = array<i64: 16, 128>}, {pipeline_mode = #tpu.pipeline_mode<synchronous>, transform_indices = @transform_1, window_bounds = array<i64: 128, 128>}, {pipeline_mode = #tpu.pipeline_mode<synchronous>, transform_indices = @transform_2, window_bounds = array<i64: 1, 128>}, {pipeline_mode = #tpu.pipeline_mode<synchronous>, transform_indices = @transform_3, window_bounds = array<i64: 128, 128>}, {pipeline_mode = #tpu.pipeline_mode<synchronous>, transform_indices = @transform_4, window_bounds = array<i64: 1, 128>}, {transform_indices = @transform_5, window_bounds = array<i64: 16, 128>}]} {
    %c0_i32 = arith.constant 0 : i32
    %0 = arith.cmpi eq, %arg1, %c0_i32 : i32
    %1 = arith.extui %0 : i1 to i32
    %c0_i32_0 = arith.constant 0 : i32
    %2 = arith.cmpi ne, %1, %c0_i32_0 : i32
    scf.if %2 {
      %cst_10 = arith.constant 0.000000e+00 : f32
      %12 = vector.broadcast %cst_10 : f32 to vector<16x128xf32>
      %c0_11 = arith.constant 0 : index
      %c0_12 = arith.constant 0 : index
      %13 = vector.load %arg8[%c0_11, %c0_12] : memref<16x128xf32, #tpu.memory_space<vmem>>, vector<16x128xf32>
      tpu.vector_store %arg8[%c0_11, %c0_12], %12 {strides = array<i32>} : memref<16x128xf32, #tpu.memory_space<vmem>>, vector<16x128xf32>,
    } else {
    }
    %c0 = arith.constant 0 : index
    %c0_1 = arith.constant 0 : index
    %3 = vector.load %arg8[%c0, %c0_1] : memref<16x128xf32, #tpu.memory_space<vmem>>, vector<16x128xf32>
    %c0_2 = arith.constant 0 : index
    %c0_3 = arith.constant 0 : index
    %4 = vector.load %arg2[%c0_2, %c0_3] : memref<16x128xf32, #tpu.memory_space<vmem>>, vector<16x128xf32>
    %c0_4 = arith.constant 0 : index
    %c0_5 = arith.constant 0 : index
    %5 = vector.load %arg3[%c0_4, %c0_5] : memref<128x128xf32, #tpu.memory_space<vmem>>, vector<128x128xf32>
    %cst = arith.constant dense<0.000000e+00> : vector<16x128xf32>
    %6 = tpu.matmul %4, %5, %cst {dimension_numbers = #tpu.dot_dimension_numbers<[1], [0], [0], [1], [0, 0, 1, 1], [], []>} : vector<16x128xf32>, vector<128x128xf32>, vector<16x128xf32> -> vector<16x128xf32>
    %7 = arith.addf %3, %6 : vector<16x128xf32>
    %c0_6 = arith.constant 0 : index
    %c0_7 = arith.constant 0 : index
    %8 = vector.load %arg8[%c0_6, %c0_7] : memref<16x128xf32, #tpu.memory_space<vmem>>, vector<16x128xf32>
    tpu.vector_store %arg8[%c0_6, %c0_7], %7 {strides = array<i32>} : memref<16x128xf32, #tpu.memory_space<vmem>>, vector<16x128xf32>,
    %c0_i32_8 = arith.constant 0 : i32
    %9 = arith.cmpi eq, %arg1, %c0_i32_8 : i32
    %10 = arith.extui %9 : i1 to i32
    %c0_i32_9 = arith.constant 0 : i32
    %11 = arith.cmpi ne, %10, %c0_i32_9 : i32
    scf.if %11 {
      %c0_10 = arith.constant 0 : index
      %c0_11 = arith.constant 0 : index
      %12 = vector.load %arg8[%c0_10, %c0_11] : memref<16x128xf32, #tpu.memory_space<vmem>>, vector<16x128xf32>
      %c0_12 = arith.constant 0 : index
      %c0_13 = arith.constant 0 : index
      %13 = vector.load %arg4[%c0_12, %c0_13] : memref<1x128xf32, #tpu.memory_space<vmem>>, vector<1x128xf32>
      %14 = vector.broadcast %13 : vector<1x128xf32> to vector<16x128xf32>
      %15 = arith.addf %12, %14 : vector<16x128xf32>
      %cst_14 = arith.constant 0.000000e+00 : f32
      %16 = vector.broadcast %cst_14 : f32 to vector<16x128xf32>
      %17 = arith.maximumf %15, %16 : vector<16x128xf32>
      %c0_15 = arith.constant 0 : index
      %c0_16 = arith.constant 0 : index
      %18 = vector.load %arg5[%c0_15, %c0_16] : memref<128x128xf32, #tpu.memory_space<vmem>>, vector<128x128xf32>
      %cst_17 = arith.constant dense<0.000000e+00> : vector<16x128xf32>
      %19 = tpu.matmul %17, %18, %cst_17 {dimension_numbers = #tpu.dot_dimension_numbers<[1], [0], [0], [1], [0, 0, 1, 1], [], []>} : vector<16x128xf32>, vector<128x128xf32>, vector<16x128xf32> -> vector<16x128xf32>
      %c0_18 = arith.constant 0 : index
      %c0_19 = arith.constant 0 : index
      %20 = vector.load %arg6[%c0_18, %c0_19] : memref<1x128xf32, #tpu.memory_space<vmem>>, vector<1x128xf32>
      %21 = vector.broadcast %20 : vector<1x128xf32> to vector<16x128xf32>
      %22 = arith.addf %19, %21 : vector<16x128xf32>
      %c0_20 = arith.constant 0 : index
      %c0_21 = arith.constant 0 : index
      %23 = vector.load %arg7[%c0_20, %c0_21] : memref<16x128xf32, #tpu.memory_space<vmem>>, vector<16x128xf32>
      tpu.vector_store %arg7[%c0_20, %c0_21], %22 {strides = array<i32>} : memref<16x128xf32, #tpu.memory_space<vmem>>, vector<16x128xf32>,
    } else {
    }
    return
  }
  func.func @transform_0(%arg0: i32, %arg1: i32) -> (i32, i32) {
    %c0_i32 = arith.constant 0 : i32
    return %arg0, %arg1 : i32, i32
  }
  func.func @transform_1(%arg0: i32, %arg1: i32) -> (i32, i32) {
    %c0_i32 = arith.constant 0 : i32
    %c0_i32_0 = arith.constant 0 : i32
    return %arg1, %c0_i32 : i32, i32
  }
  func.func @transform_2(%arg0: i32, %arg1: i32) -> (i32, i32) {
    %c0_i32 = arith.constant 0 : i32
    %c0_i32_0 = arith.constant 0 : i32
    %c0_i32_1 = arith.constant 0 : i32
    return %c0_i32, %c0_i32_0 : i32, i32
  }
  func.func @transform_3(%arg0: i32, %arg1: i32) -> (i32, i32) {
    %c0_i32 = arith.constant 0 : i32
    %c0_i32_0 = arith.constant 0 : i32
    %c0_i32_1 = arith.constant 0 : i32
    return %c0_i32, %c0_i32_0 : i32, i32
  }
  func.func @transform_4(%arg0: i32, %arg1: i32) -> (i32, i32) {
    %c0_i32 = arith.constant 0 : i32
    %c0_i32_0 = arith.constant 0 : i32
    %c0_i32_1 = arith.constant 0 : i32
    return %c0_i32, %c0_i32_0 : i32, i32
  }
  func.func @transform_5(%arg0: i32, %arg1: i32) -> (i32, i32) {
    %c0_i32 = arith.constant 0 : i32
    %c0_i32_0 = arith.constant 0 : i32
    return %arg0, %c0_i32 : i32, i32
  }
}

module attributes {stable_mosaic.version = 11 : i64} {
  func.func @mlp_kernel(%arg0: i32, %arg1: i32, %arg2: memref<16x128xf32, #tpu.memory_space<vmem>>, %arg3: memref<128x128xf32, #tpu.memory_space<vmem>>, %arg4: memref<1x128xf32, #tpu.memory_space<vmem>>, %arg5: memref<128x128xf32, #tpu.memory_space<vmem>>, %arg6: memref<1x128xf32, #tpu.memory_space<vmem>>, %arg7: memref<16x128xf32, #tpu.memory_space<vmem>>, %arg8: memref<16x128xf32, #tpu.memory_space<vmem>>) attributes {dimension_semantics = [#tpu.dimension_semantics<parallel>, #tpu.dimension_semantics<arbitrary>], iteration_bounds = array<i64: 1, 1>, scalar_prefetch = 0 : i64, scratch_operands = 1 : i64, tpu.core_type = #tpu.core_type<tc>, window_params = [{transform_indices = @transform_0, window_bounds = array<i64: 16, 128>}, {transform_indices = @transform_1, window_bounds = array<i64: 128, 128>}, {pipeline_mode = #tpu.pipeline_mode<synchronous>, transform_indices = @transform_2, window_bounds = array<i64: 1, 128>}, {pipeline_mode = #tpu.pipeline_mode<synchronous>, transform_indices = @transform_3, window_bounds = array<i64: 128, 128>}, {pipeline_mode = #tpu.pipeline_mode<synchronous>, transform_indices = @transform_4, window_bounds = array<i64: 1, 128>}, {transform_indices = @transform_5, window_bounds = array<i64: 16, 128>}]} {
    %c0_i32 = arith.constant 0 : i32
    %0 = arith.cmpi eq, %arg1, %c0_i32 : i32
    %1 = arith.extui %0 : i1 to i32
    %c0_i32_0 = arith.constant 0 : i32
    %2 = arith.cmpi ne, %1, %c0_i32_0 : i32
    scf.if %2 {
      %cst_10 = arith.constant 0.000000e+00 : f32
      %12 = vector.broadcast %cst_10 : f32 to vector<16x128xf32>
      %c0_11 = arith.constant 0 : index
      %c0_12 = arith.constant 0 : index
      %13 = vector.load %arg8[%c0_11, %c0_12] : memref<16x128xf32, #tpu.memory_space<vmem>>, vector<16x128xf32>
      tpu.vector_store %arg8[%c0_11, %c0_12], %12 {strides = array<i32>} : memref<16x128xf32, #tpu.memory_space<vmem>>, vector<16x128xf32>,
    } else {
    }
    %c0 = arith.constant 0 : index
    %c0_1 = arith.constant 0 : index
    %3 = vector.load %arg8[%c0, %c0_1] : memref<16x128xf32, #tpu.memory_space<vmem>>, vector<16x128xf32>
    %c0_2 = arith.constant 0 : index
    %c0_3 = arith.constant 0 : index
    %4 = vector.load %arg2[%c0_2, %c0_3] : memref<16x128xf32, #tpu.memory_space<vmem>>, vector<16x128xf32>
    %c0_4 = arith.constant 0 : index
    %c0_5 = arith.constant 0 : index
    %5 = vector.load %arg3[%c0_4, %c0_5] : memref<128x128xf32, #tpu.memory_space<vmem>>, vector<128x128xf32>
    %cst = arith.constant dense<0.000000e+00> : vector<16x128xf32>
    %6 = tpu.matmul %4, %5, %cst {dimension_numbers = #tpu.dot_dimension_numbers<[1], [0], [0], [1], [0, 0, 1, 1], [], []>} : vector<16x128xf32>, vector<128x128xf32>, vector<16x128xf32> -> vector<16x128xf32>
    %7 = arith.addf %3, %6 : vector<16x128xf32>
    %c0_6 = arith.constant 0 : index
    %c0_7 = arith.constant 0 : index
    %8 = vector.load %arg8[%c0_6, %c0_7] : memref<16x128xf32, #tpu.memory_space<vmem>>, vector<16x128xf32>
    tpu.vector_store %arg8[%c0_6, %c0_7], %7 {strides = array<i32>} : memref<16x128xf32, #tpu.memory_space<vmem>>, vector<16x128xf32>,
    %c0_i32_8 = arith.constant 0 : i32
    %9 = arith.cmpi eq, %arg1, %c0_i32_8 : i32
    %10 = arith.extui %9 : i1 to i32
    %c0_i32_9 = arith.constant 0 : i32
    %11 = arith.cmpi ne, %10, %c0_i32_9 : i32
    scf.if %11 {
      %c0_10 = arith.constant 0 : index
      %c0_11 = arith.constant 0 : index
      %12 = vector.load %arg8[%c0_10, %c0_11] : memref<16x128xf32, #tpu.memory_space<vmem>>, vector<16x128xf32>
      %c0_12 = arith.constant 0 : index
      %c0_13 = arith.constant 0 : index
      %13 = vector.load %arg4[%c0_12, %c0_13] : memref<1x128xf32, #tpu.memory_space<vmem>>, vector<1x128xf32>
      %14 = vector.broadcast %13 : vector<1x128xf32> to vector<16x128xf32>
      %15 = arith.addf %12, %14 : vector<16x128xf32>
      %cst_14 = arith.constant 0.000000e+00 : f32
      %16 = vector.broadcast %cst_14 : f32 to vector<16x128xf32>
      %17 = arith.maximumf %15, %16 : vector<16x128xf32>
      %c0_15 = arith.constant 0 : index
      %c0_16 = arith.constant 0 : index
      %18 = vector.load %arg5[%c0_15, %c0_16] : memref<128x128xf32, #tpu.memory_space<vmem>>, vector<128x128xf32>
      %cst_17 = arith.constant dense<0.000000e+00> : vector<16x128xf32>
      %19 = tpu.matmul %17, %18, %cst_17 {dimension_numbers = #tpu.dot_dimension_numbers<[1], [0], [0], [1], [0, 0, 1, 1], [], []>} : vector<16x128xf32>, vector<128x128xf32>, vector<16x128xf32> -> vector<16x128xf32>
      %c0_18 = arith.constant 0 : index
      %c0_19 = arith.constant 0 : index
      %20 = vector.load %arg6[%c0_18, %c0_19] : memref<1x128xf32, #tpu.memory_space<vmem>>, vector<1x128xf32>
      %21 = vector.broadcast %20 : vector<1x128xf32> to vector<16x128xf32>
      %22 = arith.addf %19, %21 : vector<16x128xf32>
      %c0_20 = arith.constant 0 : index
      %c0_21 = arith.constant 0 : index
      %23 = vector.load %arg7[%c0_20, %c0_21] : memref<16x128xf32, #tpu.memory_space<vmem>>, vector<16x128xf32>
      tpu.vector_store %arg7[%c0_20, %c0_21], %22 {strides = array<i32>} : memref<16x128xf32, #tpu.memory_space<vmem>>, vector<16x128xf32>,
    } else {
    }
    return
  }
  func.func @transform_0(%arg0: i32, %arg1: i32) -> (i32, i32) {
    %c0_i32 = arith.constant 0 : i32
    return %arg0, %arg1 : i32, i32
  }
  func.func @transform_1(%arg0: i32, %arg1: i32) -> (i32, i32) {
    %c0_i32 = arith.constant 0 : i32
    %c0_i32_0 = arith.constant 0 : i32
    return %arg1, %c0_i32 : i32, i32
  }
  func.func @transform_2(%arg0: i32, %arg1: i32) -> (i32, i32) {
    %c0_i32 = arith.constant 0 : i32
    %c0_i32_0 = arith.constant 0 : i32
    %c0_i32_1 = arith.constant 0 : i32
    return %c0_i32, %c0_i32_0 : i32, i32
  }
  func.func @transform_3(%arg0: i32, %arg1: i32) -> (i32, i32) {
    %c0_i32 = arith.constant 0 : i32
    %c0_i32_0 = arith.constant 0 : i32
    %c0_i32_1 = arith.constant 0 : i32
    return %c0_i32, %c0_i32_0 : i32, i32
  }
  func.func @transform_4(%arg0: i32, %arg1: i32) -> (i32, i32) {
    %c0_i32 = arith.constant 0 : i32
    %c0_i32_0 = arith.constant 0 : i32
    %c0_i32_1 = arith.constant 0 : i32
    return %c0_i32, %c0_i32_0 : i32, i32
  }
  func.func @transform_5(%arg0: i32, %arg1: i32) -> (i32, i32) {
    %c0_i32 = arith.constant 0 : i32
    %c0_i32_0 = arith.constant 0 : i32
    return %arg0, %c0_i32 : i32, i32
  }
}

</mosaic_0001>

<llo_original>
// kernel: tpu_custom_call.1
$region0: #{tpu_custom_call.1}
  #allocation0 [shape = 'u32[]', space=smem, size = 0x4, offset = 0x4, fixed_abs, tag = 'smem constant byte address 0x4 - core index']
  #allocation1 [shape = 'u32[144,128]{1,0:T(1,128)}', space=vmem, size = 0x12000, scoped, tag = 'internal scratch']
  #allocation2 [shape = 'f32[16,128]{1,0:T(8,128)}', space=vmem, size = 0x2000, scoped, tag = 'scratch operand']
  %s0 = inlined_call_operand.hbm [shape: f32[16,128], index: 0, kind: input, shape index: {}]
  %s1 = inlined_call_operand.hbm [shape: f32[128,128], index: 1, kind: input, shape index: {}]
  %s2 = inlined_call_operand.vmem [shape: f32[1,128], index: 2, kind: input, shape index: {}]
  %s3 = inlined_call_operand.hbm [shape: f32[128,128], index: 3, kind: input, shape index: {}]
  %s4 = inlined_call_operand.vmem [shape: f32[1,128], index: 4, kind: input, shape index: {}]
  %s5 = inlined_call_operand.hbm [shape: f32[16,128], index: 5, kind: output, shape index: {}]
  %s6 = sld [smem:[#allocation0]]
  $region50: #{tpu_custom_call.1} parent=0
    _
  %s8 = ssub.s32 1, %s6
  %s9 = scalar_select 0, %s8, %s6
  $region1: #{tpu_custom_call.1} parent=0
    #allocation3 [shape = 'u8[8192]{0}', space=vmem, size = 0x2000, scoped, tag = 'input window, operand 0, single buffered']
    #allocation4 [shape = 's32[1]{0}', space=sflag, size = 0x4, scoped, tag = 'scoped memory for tpu_custom_call.1']
    #allocation5 [shape = 's32[1]{0}', space=sflag, size = 0x4, scoped, tag = 'scoped memory for tpu_custom_call.1']
    #allocation6 [shape = 'u8[65536]{0}', space=vmem, size = 0x10000, scoped, tag = 'input window, operand 1, single buffered']
    #allocation7 [shape = 's32[1]{0}', space=sflag, size = 0x4, scoped, tag = 'scoped memory for tpu_custom_call.1']
    #allocation8 [shape = 'u8[65536]{0}', space=vmem, size = 0x10000, scoped, tag = 'input window, operand 3, single buffered']
    #allocation9 [shape = 'u8[8192]{0}', space=vmem, size = 0x2000, scoped, tag = 'output window, operand 0, single buffered']
    %10 = vsyncpa [#allocation4], 0
    %11 = vsyncpa [#allocation7], 0
    %12 = vsyncpa [#allocation5], 0
    // Predicated region
    $region2: #{tpu_custom_call.1} parent=1 // pred_check
      _
    $region3: #{tpu_custom_call.1} parent=1 // pred_check_branch
      %14 = sbr.rel (0) target = $region5
    $region4: #{tpu_custom_call.1} parent=1 // pred_region
      %s16 = ssub.s32 256, 256
      %17 = vsyncadd [#allocation4], %s16
      %s18 = sshll.u32 [#allocation3], 4
      %s19 = int_to_ptr.vmem [resolvable:$true] %s18
      %24 = dma.hbm_to_vmem [thread:$0]  %s0, 256, %s19, [#allocation4], 128, 128, 8
    $region5: #{tpu_custom_call.1} parent=1 // pred_fallthru
      _
    // Predicated region
    $region6: #{tpu_custom_call.1} parent=1 // pred_check
      _
    $region7: #{tpu_custom_call.1} parent=1 // pred_check_branch
      %26 = sbr.rel (0) target = $region9
    $region8: #{tpu_custom_call.1} parent=1 // pred_region
      %s28 = ssub.s32 2048, 2048
      %29 = vsyncadd [#allocation7], %s28
      %s30 = sshll.u32 [#allocation6], 4
      %s31 = int_to_ptr.vmem [resolvable:$true] %s30
      %36 = dma.hbm_to_vmem [thread:$0]  %s1, 2048, %s31, [#allocation7], 128, 128, 8
    $region9: #{tpu_custom_call.1} parent=1 // pred_fallthru
      _
    // Predicated region
    $region10: #{tpu_custom_call.1} parent=1 // pred_check
      _
    $region11: #{tpu_custom_call.1} parent=1 // pred_check_branch
      %38 = sbr.rel (0) target = $region13
    $region12: #{tpu_custom_call.1} parent=1 // pred_region
      _
    $region13: #{tpu_custom_call.1} parent=1 // pred_fallthru
      _
    // Predicated region
    $region14: #{tpu_custom_call.1} parent=1 // pred_check
      _
    $region15: #{tpu_custom_call.1} parent=1 // pred_check_branch
      %40 = sbr.rel (0) target = $region17
    $region16: #{tpu_custom_call.1} parent=1 // pred_region
      %s42 = ssub.s32 2048, 2048
      %43 = vsyncadd [#allocation7], %s42
      %s44 = sshll.u32 [#allocation8], 4
      %s45 = int_to_ptr.vmem [resolvable:$true] %s44
      %50 = dma.hbm_to_vmem [thread:$0]  %s3, 2048, %s45, [#allocation7], 128, 128, 8
    $region17: #{tpu_custom_call.1} parent=1 // pred_fallthru
      _
    // Predicated region
    $region18: #{tpu_custom_call.1} parent=1 // pred_check
      _
    $region19: #{tpu_custom_call.1} parent=1 // pred_check_branch
      %52 = sbr.rel (0) target = $region21
    $region20: #{tpu_custom_call.1} parent=1 // pred_region
      _
    $region21: #{tpu_custom_call.1} parent=1 // pred_fallthru
      _
    // Predicated region
    $region22: #{tpu_custom_call.1} parent=1 // pred_check
      _
    $region23: #{tpu_custom_call.1} parent=1 // pred_check_branch
      %54 = sbr.rel (0) target = $region25
    $region24: #{tpu_custom_call.1} parent=1 // pred_region
      %55 = dma.done [#allocation4], 256
    $region25: #{tpu_custom_call.1} parent=1 // pred_fallthru
      _
    // Predicated region
    $region26: #{tpu_custom_call.1} parent=1 // pred_check
      _
    $region27: #{tpu_custom_call.1} parent=1 // pred_check_branch
      %57 = sbr.rel (0) target = $region29
    $region28: #{tpu_custom_call.1} parent=1 // pred_region
      %58 = dma.done [#allocation7], 2048
    $region29: #{tpu_custom_call.1} parent=1 // pred_fallthru
      _
    // Predicated region
    $region30: #{tpu_custom_call.1} parent=1 // pred_check
      _
    $region31: #{tpu_custom_call.1} parent=1 // pred_check_branch
      %60 = sbr.rel (0) target = $region33
    $region32: #{tpu_custom_call.1} parent=1 // pred_region
      %61 = dma.done [#allocation7], 2048
    $region33: #{tpu_custom_call.1} parent=1 // pred_fallthru
      _
    %p62 = scmp.eq.s32.totalorder 0, 0
    // Predicated region
    $region34: #{tpu_custom_call.1} parent=1 // pred_check
      %p63 = pneg %p62
    $region35: #{tpu_custom_call.1} parent=1 // pred_check_branch
      %65 = sbr.rel (%p63) target = $region37
    $region36: #{tpu_custom_call.1} parent=1 // pred_region
      %66 = vst [vmem:[#allocation2] sm:$0xff] 0.0
      %67 = vst [vmem:[#allocation2 + $0x8] sm:$0xff] 0.0
    $region37: #{tpu_custom_call.1} parent=1 // pred_fallthru
      _
    %v68 = vld [vmem:[#allocation2] sm:$0xff]
    %v69 = vld [vmem:[#allocation2 + $0x8] sm:$0xff]
    %v70 = vld [vmem:[#allocation3] sm:$0xff]
    %v71 = vld [vmem:[#allocation3 + $0x8] sm:$0xff]
    %v72 = vld [vmem:[#allocation6] sm:$0xff]
    %v73 = vld [vmem:[#allocation6 + $0x8] sm:$0xff]
    %v74 = vld [vmem:[#allocation6 + $0x10] sm:$0xff]
    %v75 = vld [vmem:[#allocation6 + $0x18] sm:$0xff]
    %v76 = vld [vmem:[#allocation6 + $0x20] sm:$0xff]
    %v77 = vld [vmem:[#allocation6 + $0x28] sm:$0xff]
    %v78 = vld [vmem:[#allocation6 + $0x30] sm:$0xff]
    %v79 = vld [vmem:[#allocation6 + $0x38] sm:$0xff]
    %v80 = vld [vmem:[#allocation6 + $0x40] sm:$0xff]
    %v81 = vld [vmem:[#allocation6 + $0x48] sm:$0xff]
    %v82 = vld [vmem:[#allocation6 + $0x50] sm:$0xff]
    %v83 = vld [vmem:[#allocation6 + $0x58] sm:$0xff]
    %v84 = vld [vmem:[#allocation6 + $0x60] sm:$0xff]
    %v85 = vld [vmem:[#allocation6 + $0x68] sm:$0xff]
    %v86 = vld [vmem:[#allocation6 + $0x70] sm:$0xff]
    %v87 = vld [vmem:[#allocation6 + $0x78] sm:$0xff]
    %88 = vmatprep.subr.mxu0 0.0
    %89 = vmatpush1.msra.mxu0 %v72
    %90 = vmatprep.subr.mxu0 0.0
    %91 = vmatpush1.msra.mxu0 %v73
    %92 = vmatprep.subr.mxu0 0.0
    %93 = vmatpush1.msra.mxu0 %v74
    %94 = vmatprep.subr.mxu0 0.0
    %95 = vmatpush1.msra.mxu0 %v75
    %96 = vmatprep.subr.mxu0 0.0
    %97 = vmatpush1.msra.mxu0 %v76
    %98 = vmatprep.subr.mxu0 0.0
    %99 = vmatpush1.msra.mxu0 %v77
    %100 = vmatprep.subr.mxu0 0.0
    %101 = vmatpush1.msra.mxu0 %v78
    %102 = vmatprep.subr.mxu0 0.0
    %103 = vmatpush1.msra.mxu0 %v79
    %104 = vmatprep.subr.mxu0 0.0
    %105 = vmatpush1.msra.mxu0 %v80
    %106 = vmatprep.subr.mxu0 0.0
    %107 = vmatpush1.msra.mxu0 %v81
    %108 = vmatprep.subr.mxu0 0.0
    %109 = vmatpush1.msra.mxu0 %v82
    %110 = vmatprep.subr.mxu0 0.0
    %111 = vmatpush1.msra.mxu0 %v83
    %112 = vmatprep.subr.mxu0 0.0
    %113 = vmatpush1.msra.mxu0 %v84
    %114 = vmatprep.subr.mxu0 0.0
    %115 = vmatpush1.msra.mxu0 %v85
    %116 = vmatprep.subr.mxu0 0.0
    %117 = vmatpush1.msra.mxu0 %v86
    %118 = vmatprep.subr.mxu0 0.0
    %119 = vmatpush1.msra.mxu0 %v87
    %120 = vmatprep.subr.mxu0 0.0
    %121 = vmatpush1.msra.mxu0 0.0
    %122 = vmatprep.subr.mxu0 0.0
    %123 = vmatpush1.msra.mxu0 0.0
    %124 = vmatprep.subr.mxu0 0.0
    %125 = vmatpush1.msra.mxu0 0.0
    %126 = vmatprep.subr.mxu0 0.0
    %127 = vmatpush1.msra.mxu0 0.0
    %128 = vmatprep.subr.mxu0 0.0
    %129 = vmatpush1.msra.mxu0 0.0
    %130 = vmatprep.subr.mxu0 0.0
    %131 = vmatpush1.msra.mxu0 0.0
    %132 = vmatprep.subr.mxu0 0.0
    %133 = vmatpush1.msra.mxu0 0.0
    %134 = vmatprep.subr.mxu0 0.0
    %135 = vmatpush1.msra.mxu0 0.0
    %136 = vmatprep.subr.mxu0 0.0
    %137 = vmatpush1.msra.mxu0 0.0
    %138 = vmatprep.subr.mxu0 0.0
    %139 = vmatpush1.msra.mxu0 0.0
    %140 = vmatprep.subr.mxu0 0.0
    %141 = vmatpush1.msra.mxu0 0.0
    %142 = vmatprep.subr.mxu0 0.0
    %143 = vmatpush1.msra.mxu0 0.0
    %144 = vmatprep.subr.mxu0 0.0
    %145 = vmatpush1.msra.mxu0 0.0
    %146 = vmatprep.subr.mxu0 0.0
    %147 = vmatpush1.msra.mxu0 0.0
    %148 = vmatprep.subr.mxu0 0.0
    %149 = vmatpush1.msra.mxu0 0.0
    %150 = vmatprep.subr.mxu0 0.0
    %151 = vmatpush1.msra.mxu0 0.0
    %152 = vmatprep.mubr.f32.mxu0 0.0
    %153 = vmatmul.mubr.f32.gmra.mrb[0].mxu0 %v70
    %v154 = vpop.f32.mrb[0].mxu0
    %v155 = vadd.f32 0.0, %v154
    %v156 = vpop.f32.mrb[0].mxu0
    %157 = vmatprep.mubr.f32.mxu0 0.0
    %158 = vmatmul.mubr.f32.gmra.mrb[0].mxu0 %v71
    %v159 = vpop.f32.mrb[0].mxu0
    %v160 = vadd.f32 0.0, %v159
    %v161 = vpop.f32.mrb[0].mxu0
    %162 = vdwg.mxu0
    %v163 = vadd.f32 %v68, %v155
    %v164 = vadd.f32 %v69, %v160
    %165 = vst [vmem:[#allocation2] sm:$0xff] %v163
    %166 = vst [vmem:[#allocation2 + $0x8] sm:$0xff] %v164
    // Predicated region
    $region38: #{tpu_custom_call.1} parent=1 // pred_check
      %p167 = pneg %p62
    $region39: #{tpu_custom_call.1} parent=1 // pred_check_branch
      %169 = sbr.rel (%p167) target = $region41
    $region40: #{tpu_custom_call.1} parent=1 // pred_region
      %v170 = vld [vmem:[#allocation2] sm:$0xff]
      %v171 = vld [vmem:[#allocation2 + $0x8] sm:$0xff]
      %v172 = vld [vmem:[%s2] sm:$0x1]
      %v174 = vlaneseq
      %v175 = vshrl.u32 %v174, 7
      %v176 = vsub.s32 0, %v175
      %v177 = vrot.slane %v172, %v176
      %v179 = vadd.f32 %v170, %v177
      %v180 = vadd.f32 %v171, %v177
      %v181 = vmax.f32 %v179, 0.0
      %v182 = vmax.f32 %v180, 0.0
      %v183 = vld [vmem:[#allocation8] sm:$0xff]
      %v184 = vld [vmem:[#allocation8 + $0x8] sm:$0xff]
      %v185 = vld [vmem:[#allocation8 + $0x10] sm:$0xff]
      %v186 = vld [vmem:[#allocation8 + $0x18] sm:$0xff]
      %v187 = vld [vmem:[#allocation8 + $0x20] sm:$0xff]
      %v188 = vld [vmem:[#allocation8 + $0x28] sm:$0xff]
      %v189 = vld [vmem:[#allocation8 + $0x30] sm:$0xff]
      %v190 = vld [vmem:[#allocation8 + $0x38] sm:$0xff]
      %v191 = vld [vmem:[#allocation8 + $0x40] sm:$0xff]
      %v192 = vld [vmem:[#allocation8 + $0x48] sm:$0xff]
      %v193 = vld [vmem:[#allocation8 + $0x50] sm:$0xff]
      %v194 = vld [vmem:[#allocation8 + $0x58] sm:$0xff]
      %v195 = vld [vmem:[#allocation8 + $0x60] sm:$0xff]
      %v196 = vld [vmem:[#allocation8 + $0x68] sm:$0xff]
      %v197 = vld [vmem:[#allocation8 + $0x70] sm:$0xff]
      %v198 = vld [vmem:[#allocation8 + $0x78] sm:$0xff]
      %v199 = vld [vmem:[%s4] sm:$0x1]
      %v201 = vlaneseq
      %v202 = vshrl.u32 %v201, 7
      %v203 = vsub.s32 0, %v202
      %v204 = vrot.slane %v199, %v203
      %206 = vmatprep.subr.mxu0 0.0
      %207 = vmatpush1.msra.mxu0 %v183
      %208 = vmatprep.subr.mxu0 0.0
      %209 = vmatpush1.msra.mxu0 %v184
      %210 = vmatprep.subr.mxu0 0.0
      %211 = vmatpush1.msra.mxu0 %v185
      %212 = vmatprep.subr.mxu0 0.0
      %213 = vmatpush1.msra.mxu0 %v186
      %214 = vmatprep.subr.mxu0 0.0
      %215 = vmatpush1.msra.mxu0 %v187
      %216 = vmatprep.subr.mxu0 0.0
      %217 = vmatpush1.msra.mxu0 %v188
      %218 = vmatprep.subr.mxu0 0.0
      %219 = vmatpush1.msra.mxu0 %v189
      %220 = vmatprep.subr.mxu0 0.0
      %221 = vmatpush1.msra.mxu0 %v190
      %222 = vmatprep.subr.mxu0 0.0
      %223 = vmatpush1.msra.mxu0 %v191
      %224 = vmatprep.subr.mxu0 0.0
      %225 = vmatpush1.msra.mxu0 %v192
      %226 = vmatprep.subr.mxu0 0.0
      %227 = vmatpush1.msra.mxu0 %v193
      %228 = vmatprep.subr.mxu0 0.0
      %229 = vmatpush1.msra.mxu0 %v194
      %230 = vmatprep.subr.mxu0 0.0
      %231 = vmatpush1.msra.mxu0 %v195
      %232 = vmatprep.subr.mxu0 0.0
      %233 = vmatpush1.msra.mxu0 %v196
      %234 = vmatprep.subr.mxu0 0.0
      %235 = vmatpush1.msra.mxu0 %v197
      %236 = vmatprep.subr.mxu0 0.0
      %237 = vmatpush1.msra.mxu0 %v198
      %238 = vmatprep.subr.mxu0 0.0
      %239 = vmatpush1.msra.mxu0 0.0
      %240 = vmatprep.subr.mxu0 0.0
      %241 = vmatpush1.msra.mxu0 0.0
      %242 = vmatprep.subr.mxu0 0.0
      %243 = vmatpush1.msra.mxu0 0.0
      %244 = vmatprep.subr.mxu0 0.0
      %245 = vmatpush1.msra.mxu0 0.0
      %246 = vmatprep.subr.mxu0 0.0
      %247 = vmatpush1.msra.mxu0 0.0
      %248 = vmatprep.subr.mxu0 0.0
      %249 = vmatpush1.msra.mxu0 0.0
      %250 = vmatprep.subr.mxu0 0.0
      %251 = vmatpush1.msra.mxu0 0.0
      %252 = vmatprep.subr.mxu0 0.0
      %253 = vmatpush1.msra.mxu0 0.0
      %254 = vmatprep.subr.mxu0 0.0
      %255 = vmatpush1.msra.mxu0 0.0
      %256 = vmatprep.subr.mxu0 0.0
      %257 = vmatpush1.msra.mxu0 0.0
      %258 = vmatprep.subr.mxu0 0.0
      %259 = vmatpush1.msra.mxu0 0.0
      %260 = vmatprep.subr.mxu0 0.0
      %261 = vmatpush1.msra.mxu0 0.0
      %262 = vmatprep.subr.mxu0 0.0
      %263 = vmatpush1.msra.mxu0 0.0
      %264 = vmatprep.subr.mxu0 0.0
      %265 = vmatpush1.msra.mxu0 0.0
      %266 = vmatprep.subr.mxu0 0.0
      %267 = vmatpush1.msra.mxu0 0.0
      %268 = vmatprep.subr.mxu0 0.0
      %269 = vmatpush1.msra.mxu0 0.0
      %270 = vmatprep.mubr.f32.mxu0 0.0
      %271 = vmatmul.mubr.f32.gmra.mrb[0].mxu0 %v181
      %v272 = vpop.f32.mrb[0].mxu0
      %v273 = vadd.f32 %v204, %v272
      %v274 = vpop.f32.mrb[0].mxu0
      %275 = vmatprep.mubr.f32.mxu0 0.0
      %276 = vmatmul.mubr.f32.gmra.mrb[0].mxu0 %v182
      %v277 = vpop.f32.mrb[0].mxu0
      %v278 = vadd.f32 %v204, %v277
      %v279 = vpop.f32.mrb[0].mxu0
      %280 = vdwg.mxu0
      %281 = vst [vmem:[#allocation9] sm:$0xff] %v273
      %282 = vst [vmem:[#allocation9 + $0x8] sm:$0xff] %v278
    $region41: #{tpu_custom_call.1} parent=1 // pred_fallthru
      _
    // Predicated region
    $region42: #{tpu_custom_call.1} parent=1 // pred_check
      _
    $region43: #{tpu_custom_call.1} parent=1 // pred_check_branch
      %284 = sbr.rel (0) target = $region45
    $region44: #{tpu_custom_call.1} parent=1 // pred_region
      %s286 = ssub.s32 256, 256
      %287 = vsyncadd [#allocation5], %s286
      %s288 = sshll.u32 [#allocation9], 4
      %s289 = int_to_ptr.vmem [resolvable:$true] %s288
      %294 = dma.vmem_to_hbm [thread:$0]  %s289, 256, %s5, [#allocation5], 128, 128, 8
    $region45: #{tpu_custom_call.1} parent=1 // pred_fallthru
      _
    // Predicated region
    $region46: #{tpu_custom_call.1} parent=1 // pred_check
      _
    $region47: #{tpu_custom_call.1} parent=1 // pred_check_branch
      %296 = sbr.rel (0) target = $region49
    $region48: #{tpu_custom_call.1} parent=1 // pred_region
      %297 = dma.done [#allocation5], 256
    $region49: #{tpu_custom_call.1} parent=1 // pred_fallthru
      _
    %298 = vsyncpa [#allocation4], 1
    %299 = vsyncpa [#allocation7], 1
    %300 = vsyncpa [#allocation5], 1

// kernel: tpu_custom_call.1
$region0: #{tpu_custom_call.1}
  #allocation0 [shape = 'u32[]', space=smem, size = 0x4, offset = 0x4, fixed_abs, tag = 'smem constant byte address 0x4 - core index']
  #allocation1 [shape = 'u32[144,128]{1,0:T(1,128)}', space=vmem, size = 0x12000, scoped, tag = 'internal scratch']
  #allocation2 [shape = 'f32[16,128]{1,0:T(8,128)}', space=vmem, size = 0x2000, scoped, tag = 'scratch operand']
  %s0 = inlined_call_operand.hbm [shape: f32[16,128], index: 0, kind: input, shape index: {}]
  %s1 = inlined_call_operand.hbm [shape: f32[128,128], index: 1, kind: input, shape index: {}]
  %s2 = inlined_call_operand.vmem [shape: f32[1,128], index: 2, kind: input, shape index: {}]
  %s3 = inlined_call_operand.hbm [shape: f32[128,128], index: 3, kind: input, shape index: {}]
  %s4 = inlined_call_operand.vmem [shape: f32[1,128], index: 4, kind: input, shape index: {}]
  %s5 = inlined_call_operand.hbm [shape: f32[16,128], index: 5, kind: output, shape index: {}]
  %s6 = sld [smem:[#allocation0]]
  $region50: #{tpu_custom_call.1} parent=0
    _
  %s8 = ssub.s32 1, %s6
  %s9 = scalar_select 0, %s8, %s6
  $region1: #{tpu_custom_call.1} parent=0
    #allocation3 [shape = 'u8[8192]{0}', space=vmem, size = 0x2000, scoped, tag = 'input window, operand 0, single buffered']
    #allocation4 [shape = 's32[1]{0}', space=sflag, size = 0x4, scoped, tag = 'scoped memory for tpu_custom_call.1']
    #allocation5 [shape = 's32[1]{0}', space=sflag, size = 0x4, scoped, tag = 'scoped memory for tpu_custom_call.1']
    #allocation6 [shape = 'u8[65536]{0}', space=vmem, size = 0x10000, scoped, tag = 'input window, operand 1, single buffered']
    #allocation7 [shape = 's32[1]{0}', space=sflag, size = 0x4, scoped, tag = 'scoped memory for tpu_custom_call.1']
    #allocation8 [shape = 'u8[65536]{0}', space=vmem, size = 0x10000, scoped, tag = 'input window, operand 3, single buffered']
    #allocation9 [shape = 'u8[8192]{0}', space=vmem, size = 0x2000, scoped, tag = 'output window, operand 0, single buffered']
    %10 = vsyncpa [#allocation4], 0
    %11 = vsyncpa [#allocation7], 0
    %12 = vsyncpa [#allocation5], 0
    // Predicated region
    $region2: #{tpu_custom_call.1} parent=1 // pred_check
      _
    $region3: #{tpu_custom_call.1} parent=1 // pred_check_branch
      %14 = sbr.rel (0) target = $region5
    $region4: #{tpu_custom_call.1} parent=1 // pred_region
      %s16 = ssub.s32 256, 256
      %17 = vsyncadd [#allocation4], %s16
      %s18 = sshll.u32 [#allocation3], 4
      %s19 = int_to_ptr.vmem [resolvable:$true] %s18
      %24 = dma.hbm_to_vmem [thread:$0]  %s0, 256, %s19, [#allocation4], 128, 128, 8
    $region5: #{tpu_custom_call.1} parent=1 // pred_fallthru
      _
    // Predicated region
    $region6: #{tpu_custom_call.1} parent=1 // pred_check
      _
    $region7: #{tpu_custom_call.1} parent=1 // pred_check_branch
      %26 = sbr.rel (0) target = $region9
    $region8: #{tpu_custom_call.1} parent=1 // pred_region
      %s28 = ssub.s32 2048, 2048
      %29 = vsyncadd [#allocation7], %s28
      %s30 = sshll.u32 [#allocation6], 4
      %s31 = int_to_ptr.vmem [resolvable:$true] %s30
      %36 = dma.hbm_to_vmem [thread:$0]  %s1, 2048, %s31, [#allocation7], 128, 128, 8
    $region9: #{tpu_custom_call.1} parent=1 // pred_fallthru
      _
    // Predicated region
    $region10: #{tpu_custom_call.1} parent=1 // pred_check
      _
    $region11: #{tpu_custom_call.1} parent=1 // pred_check_branch
      %38 = sbr.rel (0) target = $region13
    $region12: #{tpu_custom_call.1} parent=1 // pred_region
      _
    $region13: #{tpu_custom_call.1} parent=1 // pred_fallthru
      _
    // Predicated region
    $region14: #{tpu_custom_call.1} parent=1 // pred_check
      _
    $region15: #{tpu_custom_call.1} parent=1 // pred_check_branch
      %40 = sbr.rel (0) target = $region17
    $region16: #{tpu_custom_call.1} parent=1 // pred_region
      %s42 = ssub.s32 2048, 2048
      %43 = vsyncadd [#allocation7], %s42
      %s44 = sshll.u32 [#allocation8], 4
      %s45 = int_to_ptr.vmem [resolvable:$true] %s44
      %50 = dma.hbm_to_vmem [thread:$0]  %s3, 2048, %s45, [#allocation7], 128, 128, 8
    $region17: #{tpu_custom_call.1} parent=1 // pred_fallthru
      _
    // Predicated region
    $region18: #{tpu_custom_call.1} parent=1 // pred_check
      _
    $region19: #{tpu_custom_call.1} parent=1 // pred_check_branch
      %52 = sbr.rel (0) target = $region21
    $region20: #{tpu_custom_call.1} parent=1 // pred_region
      _
    $region21: #{tpu_custom_call.1} parent=1 // pred_fallthru
      _
    // Predicated region
    $region22: #{tpu_custom_call.1} parent=1 // pred_check
      _
    $region23: #{tpu_custom_call.1} parent=1 // pred_check_branch
      %54 = sbr.rel (0) target = $region25
    $region24: #{tpu_custom_call.1} parent=1 // pred_region
      %55 = dma.done [#allocation4], 256
    $region25: #{tpu_custom_call.1} parent=1 // pred_fallthru
      _
    // Predicated region
    $region26: #{tpu_custom_call.1} parent=1 // pred_check
      _
    $region27: #{tpu_custom_call.1} parent=1 // pred_check_branch
      %57 = sbr.rel (0) target = $region29
    $region28: #{tpu_custom_call.1} parent=1 // pred_region
      %58 = dma.done [#allocation7], 2048
    $region29: #{tpu_custom_call.1} parent=1 // pred_fallthru
      _
    // Predicated region
    $region30: #{tpu_custom_call.1} parent=1 // pred_check
      _
    $region31: #{tpu_custom_call.1} parent=1 // pred_check_branch
      %60 = sbr.rel (0) target = $region33
    $region32: #{tpu_custom_call.1} parent=1 // pred_region
      %61 = dma.done [#allocation7], 2048
    $region33: #{tpu_custom_call.1} parent=1 // pred_fallthru
      _
    %p62 = scmp.eq.s32.totalorder 0, 0
    // Predicated region
    $region34: #{tpu_custom_call.1} parent=1 // pred_check
      %p63 = pneg %p62
    $region35: #{tpu_custom_call.1} parent=1 // pred_check_branch
      %65 = sbr.rel (%p63) target = $region37
    $region36: #{tpu_custom_call.1} parent=1 // pred_region
      %66 = vst [vmem:[#allocation2] sm:$0xff] 0.0
      %67 = vst [vmem:[#allocation2 + $0x8] sm:$0xff] 0.0
    $region37: #{tpu_custom_call.1} parent=1 // pred_fallthru
      _
    %v68 = vld [vmem:[#allocation2] sm:$0xff]
    %v69 = vld [vmem:[#allocation2 + $0x8] sm:$0xff]
    %v70 = vld [vmem:[#allocation3] sm:$0xff]
    %v71 = vld [vmem:[#allocation3 + $0x8] sm:$0xff]
    %v72 = vld [vmem:[#allocation6] sm:$0xff]
    %v73 = vld [vmem:[#allocation6 + $0x8] sm:$0xff]
    %v74 = vld [vmem:[#allocation6 + $0x10] sm:$0xff]
    %v75 = vld [vmem:[#allocation6 + $0x18] sm:$0xff]
    %v76 = vld [vmem:[#allocation6 + $0x20] sm:$0xff]
    %v77 = vld [vmem:[#allocation6 + $0x28] sm:$0xff]
    %v78 = vld [vmem:[#allocation6 + $0x30] sm:$0xff]
    %v79 = vld [vmem:[#allocation6 + $0x38] sm:$0xff]
    %v80 = vld [vmem:[#allocation6 + $0x40] sm:$0xff]
    %v81 = vld [vmem:[#allocation6 + $0x48] sm:$0xff]
    %v82 = vld [vmem:[#allocation6 + $0x50] sm:$0xff]
    %v83 = vld [vmem:[#allocation6 + $0x58] sm:$0xff]
    %v84 = vld [vmem:[#allocation6 + $0x60] sm:$0xff]
    %v85 = vld [vmem:[#allocation6 + $0x68] sm:$0xff]
    %v86 = vld [vmem:[#allocation6 + $0x70] sm:$0xff]
    %v87 = vld [vmem:[#allocation6 + $0x78] sm:$0xff]
    %88 = vmatprep.subr.mxu0 0.0
    %89 = vmatpush1.msra.mxu0 %v72
    %90 = vmatprep.subr.mxu0 0.0
    %91 = vmatpush1.msra.mxu0 %v73
    %92 = vmatprep.subr.mxu0 0.0
    %93 = vmatpush1.msra.mxu0 %v74
    %94 = vmatprep.subr.mxu0 0.0
    %95 = vmatpush1.msra.mxu0 %v75
    %96 = vmatprep.subr.mxu0 0.0
    %97 = vmatpush1.msra.mxu0 %v76
    %98 = vmatprep.subr.mxu0 0.0
    %99 = vmatpush1.msra.mxu0 %v77
    %100 = vmatprep.subr.mxu0 0.0
    %101 = vmatpush1.msra.mxu0 %v78
    %102 = vmatprep.subr.mxu0 0.0
    %103 = vmatpush1.msra.mxu0 %v79
    %104 = vmatprep.subr.mxu0 0.0
    %105 = vmatpush1.msra.mxu0 %v80
    %106 = vmatprep.subr.mxu0 0.0
    %107 = vmatpush1.msra.mxu0 %v81
    %108 = vmatprep.subr.mxu0 0.0
    %109 = vmatpush1.msra.mxu0 %v82
    %110 = vmatprep.subr.mxu0 0.0
    %111 = vmatpush1.msra.mxu0 %v83
    %112 = vmatprep.subr.mxu0 0.0
    %113 = vmatpush1.msra.mxu0 %v84
    %114 = vmatprep.subr.mxu0 0.0
    %115 = vmatpush1.msra.mxu0 %v85
    %116 = vmatprep.subr.mxu0 0.0
    %117 = vmatpush1.msra.mxu0 %v86
    %118 = vmatprep.subr.mxu0 0.0
    %119 = vmatpush1.msra.mxu0 %v87
    %120 = vmatprep.subr.mxu0 0.0
    %121 = vmatpush1.msra.mxu0 0.0
    %122 = vmatprep.subr.mxu0 0.0
    %123 = vmatpush1.msra.mxu0 0.0
    %124 = vmatprep.subr.mxu0 0.0
    %125 = vmatpush1.msra.mxu0 0.0
    %126 = vmatprep.subr.mxu0 0.0
    %127 = vmatpush1.msra.mxu0 0.0
    %128 = vmatprep.subr.mxu0 0.0
    %129 = vmatpush1.msra.mxu0 0.0
    %130 = vmatprep.subr.mxu0 0.0
    %131 = vmatpush1.msra.mxu0 0.0
    %132 = vmatprep.subr.mxu0 0.0
    %133 = vmatpush1.msra.mxu0 0.0
    %134 = vmatprep.subr.mxu0 0.0
    %135 = vmatpush1.msra.mxu0 0.0
    %136 = vmatprep.subr.mxu0 0.0
    %137 = vmatpush1.msra.mxu0 0.0
    %138 = vmatprep.subr.mxu0 0.0
    %139 = vmatpush1.msra.mxu0 0.0
    %140 = vmatprep.subr.mxu0 0.0
    %141 = vmatpush1.msra.mxu0 0.0
    %142 = vmatprep.subr.mxu0 0.0
    %143 = vmatpush1.msra.mxu0 0.0
    %144 = vmatprep.subr.mxu0 0.0
    %145 = vmatpush1.msra.mxu0 0.0
    %146 = vmatprep.subr.mxu0 0.0
    %147 = vmatpush1.msra.mxu0 0.0
    %148 = vmatprep.subr.mxu0 0.0
    %149 = vmatpush1.msra.mxu0 0.0
    %150 = vmatprep.subr.mxu0 0.0
    %151 = vmatpush1.msra.mxu0 0.0
    %152 = vmatprep.mubr.f32.mxu0 0.0
    %153 = vmatmul.mubr.f32.gmra.mrb[0].mxu0 %v70
    %v154 = vpop.f32.mrb[0].mxu0
    %v155 = vadd.f32 0.0, %v154
    %v156 = vpop.f32.mrb[0].mxu0
    %157 = vmatprep.mubr.f32.mxu0 0.0
    %158 = vmatmul.mubr.f32.gmra.mrb[0].mxu0 %v71
    %v159 = vpop.f32.mrb[0].mxu0
    %v160 = vadd.f32 0.0, %v159
    %v161 = vpop.f32.mrb[0].mxu0
    %162 = vdwg.mxu0
    %v163 = vadd.f32 %v68, %v155
    %v164 = vadd.f32 %v69, %v160
    %165 = vst [vmem:[#allocation2] sm:$0xff] %v163
    %166 = vst [vmem:[#allocation2 + $0x8] sm:$0xff] %v164
    // Predicated region
    $region38: #{tpu_custom_call.1} parent=1 // pred_check
      %p167 = pneg %p62
    $region39: #{tpu_custom_call.1} parent=1 // pred_check_branch
      %169 = sbr.rel (%p167) target = $region41
    $region40: #{tpu_custom_call.1} parent=1 // pred_region
      %v170 = vld [vmem:[#allocation2] sm:$0xff]
      %v171 = vld [vmem:[#allocation2 + $0x8] sm:$0xff]
      %v172 = vld [vmem:[%s2] sm:$0x1]
      %v174 = vlaneseq
      %v175 = vshrl.u32 %v174, 7
      %v176 = vsub.s32 0, %v175
      %v177 = vrot.slane %v172, %v176
      %v179 = vadd.f32 %v170, %v177
      %v180 = vadd.f32 %v171, %v177
      %v181 = vmax.f32 %v179, 0.0
      %v182 = vmax.f32 %v180, 0.0
      %v183 = vld [vmem:[#allocation8] sm:$0xff]
      %v184 = vld [vmem:[#allocation8 + $0x8] sm:$0xff]
      %v185 = vld [vmem:[#allocation8 + $0x10] sm:$0xff]
      %v186 = vld [vmem:[#allocation8 + $0x18] sm:$0xff]
      %v187 = vld [vmem:[#allocation8 + $0x20] sm:$0xff]
      %v188 = vld [vmem:[#allocation8 + $0x28] sm:$0xff]
      %v189 = vld [vmem:[#allocation8 + $0x30] sm:$0xff]
      %v190 = vld [vmem:[#allocation8 + $0x38] sm:$0xff]
      %v191 = vld [vmem:[#allocation8 + $0x40] sm:$0xff]
      %v192 = vld [vmem:[#allocation8 + $0x48] sm:$0xff]
      %v193 = vld [vmem:[#allocation8 + $0x50] sm:$0xff]
      %v194 = vld [vmem:[#allocation8 + $0x58] sm:$0xff]
      %v195 = vld [vmem:[#allocation8 + $0x60] sm:$0xff]
      %v196 = vld [vmem:[#allocation8 + $0x68] sm:$0xff]
      %v197 = vld [vmem:[#allocation8 + $0x70] sm:$0xff]
      %v198 = vld [vmem:[#allocation8 + $0x78] sm:$0xff]
      %v199 = vld [vmem:[%s4] sm:$0x1]
      %v201 = vlaneseq
      %v202 = vshrl.u32 %v201, 7
      %v203 = vsub.s32 0, %v202
      %v204 = vrot.slane %v199, %v203
      %206 = vmatprep.subr.mxu0 0.0
      %207 = vmatpush1.msra.mxu0 %v183
      %208 = vmatprep.subr.mxu0 0.0
      %209 = vmatpush1.msra.mxu0 %v184
      %210 = vmatprep.subr.mxu0 0.0
      %211 = vmatpush1.msra.mxu0 %v185
      %212 = vmatprep.subr.mxu0 0.0
      %213 = vmatpush1.msra.mxu0 %v186
      %214 = vmatprep.subr.mxu0 0.0
      %215 = vmatpush1.msra.mxu0 %v187
      %216 = vmatprep.subr.mxu0 0.0
      %217 = vmatpush1.msra.mxu0 %v188
      %218 = vmatprep.subr.mxu0 0.0
      %219 = vmatpush1.msra.mxu0 %v189
      %220 = vmatprep.subr.mxu0 0.0
      %221 = vmatpush1.msra.mxu0 %v190
      %222 = vmatprep.subr.mxu0 0.0
      %223 = vmatpush1.msra.mxu0 %v191
      %224 = vmatprep.subr.mxu0 0.0
      %225 = vmatpush1.msra.mxu0 %v192
      %226 = vmatprep.subr.mxu0 0.0
      %227 = vmatpush1.msra.mxu0 %v193
      %228 = vmatprep.subr.mxu0 0.0
      %229 = vmatpush1.msra.mxu0 %v194
      %230 = vmatprep.subr.mxu0 0.0
      %231 = vmatpush1.msra.mxu0 %v195
      %232 = vmatprep.subr.mxu0 0.0
      %233 = vmatpush1.msra.mxu0 %v196
      %234 = vmatprep.subr.mxu0 0.0
      %235 = vmatpush1.msra.mxu0 %v197
      %236 = vmatprep.subr.mxu0 0.0
      %237 = vmatpush1.msra.mxu0 %v198
      %238 = vmatprep.subr.mxu0 0.0
      %239 = vmatpush1.msra.mxu0 0.0
      %240 = vmatprep.subr.mxu0 0.0
      %241 = vmatpush1.msra.mxu0 0.0
      %242 = vmatprep.subr.mxu0 0.0
      %243 = vmatpush1.msra.mxu0 0.0
      %244 = vmatprep.subr.mxu0 0.0
      %245 = vmatpush1.msra.mxu0 0.0
      %246 = vmatprep.subr.mxu0 0.0
      %247 = vmatpush1.msra.mxu0 0.0
      %248 = vmatprep.subr.mxu0 0.0
      %249 = vmatpush1.msra.mxu0 0.0
      %250 = vmatprep.subr.mxu0 0.0
      %251 = vmatpush1.msra.mxu0 0.0
      %252 = vmatprep.subr.mxu0 0.0
      %253 = vmatpush1.msra.mxu0 0.0
      %254 = vmatprep.subr.mxu0 0.0
      %255 = vmatpush1.msra.mxu0 0.0
      %256 = vmatprep.subr.mxu0 0.0
      %257 = vmatpush1.msra.mxu0 0.0
      %258 = vmatprep.subr.mxu0 0.0
      %259 = vmatpush1.msra.mxu0 0.0
      %260 = vmatprep.subr.mxu0 0.0
      %261 = vmatpush1.msra.mxu0 0.0
      %262 = vmatprep.subr.mxu0 0.0
      %263 = vmatpush1.msra.mxu0 0.0
      %264 = vmatprep.subr.mxu0 0.0
      %265 = vmatpush1.msra.mxu0 0.0
      %266 = vmatprep.subr.mxu0 0.0
      %267 = vmatpush1.msra.mxu0 0.0
      %268 = vmatprep.subr.mxu0 0.0
      %269 = vmatpush1.msra.mxu0 0.0
      %270 = vmatprep.mubr.f32.mxu0 0.0
      %271 = vmatmul.mubr.f32.gmra.mrb[0].mxu0 %v181
      %v272 = vpop.f32.mrb[0].mxu0
      %v273 = vadd.f32 %v204, %v272
      %v274 = vpop.f32.mrb[0].mxu0
      %275 = vmatprep.mubr.f32.mxu0 0.0
      %276 = vmatmul.mubr.f32.gmra.mrb[0].mxu0 %v182
      %v277 = vpop.f32.mrb[0].mxu0
      %v278 = vadd.f32 %v204, %v277
      %v279 = vpop.f32.mrb[0].mxu0
      %280 = vdwg.mxu0
      %281 = vst [vmem:[#allocation9] sm:$0xff] %v273
      %282 = vst [vmem:[#allocation9 + $0x8] sm:$0xff] %v278
    $region41: #{tpu_custom_call.1} parent=1 // pred_fallthru
      _
    // Predicated region
    $region42: #{tpu_custom_call.1} parent=1 // pred_check
      _
    $region43: #{tpu_custom_call.1} parent=1 // pred_check_branch
      %284 = sbr.rel (0) target = $region45
    $region44: #{tpu_custom_call.1} parent=1 // pred_region
      %s286 = ssub.s32 256, 256
      %287 = vsyncadd [#allocation5], %s286
      %s288 = sshll.u32 [#allocation9], 4
      %s289 = int_to_ptr.vmem [resolvable:$true] %s288
      %294 = dma.vmem_to_hbm [thread:$0]  %s289, 256, %s5, [#allocation5], 128, 128, 8
    $region45: #{tpu_custom_call.1} parent=1 // pred_fallthru
      _
    // Predicated region
    $region46: #{tpu_custom_call.1} parent=1 // pred_check
      _
    $region47: #{tpu_custom_call.1} parent=1 // pred_check_branch
      %296 = sbr.rel (0) target = $region49
    $region48: #{tpu_custom_call.1} parent=1 // pred_region
      %297 = dma.done [#allocation5], 256
    $region49: #{tpu_custom_call.1} parent=1 // pred_fallthru
      _
    %298 = vsyncpa [#allocation4], 1
    %299 = vsyncpa [#allocation7], 1
    %300 = vsyncpa [#allocation5], 1

</llo_original>
